<compile_context>
chip_gen: v7x
topology: tpu7x:2x2x1
jax: 0.10.0
libtpu: 0.0.40
codegen_flags: <defaults>
</compile_context>

<pallas_src>
import jax
import jax.numpy as jnp
from jax.experimental import pallas as pl
from jax.experimental.pallas import tpu as pltpu


# ---------------------------------------------------------------------------
# Fixed-point fake quantization helpers (QuantizeParam / QuantizeFeature)
# ---------------------------------------------------------------------------
def _fake_quant(v, bitwidth, frac):
    """Symmetric fixed-point fake quant: clamp(round(v * 2^frac)) * 2^-frac.

    `frac` may be a scalar or a per-channel array (QuantizeParam type=2).
    """
    # TODO(synk): exact rounding mode of ndk's QuantizeParam/QuantizeFeature is
    # not in the provided source; round-to-nearest(-even) is used here.
    frac = jnp.asarray(frac, dtype=v.dtype)
    scale = jnp.exp2(frac)
    qmin = -(2.0 ** (bitwidth - 1))
    qmax = 2.0 ** (bitwidth - 1) - 1.0
    return jnp.clip(jnp.round(v * scale), qmin, qmax) * jnp.exp2(-frac)


# ---------------------------------------------------------------------------
# Tiling helpers
# ---------------------------------------------------------------------------
def _round_up(x, m):
    return ((x + m - 1) // m) * m


def _row_align(dtype):
    # Sub-32-bit dtypes pack along sublanes: 8 rows/vreg f32, 16 bf16, 32 int8.
    return 8 * (4 // jnp.dtype(dtype).itemsize)


def _pick_block(dim, target, align):
    """Aligned block <= min(target, dim); full extent for dims smaller than align.

    Used with a cdiv grid, so the block does NOT need to divide `dim`; the
    ragged edge block is masked by Pallas. This keeps blocks (8,128)-aligned
    in all cases (no masked vst.msk on the lane dim, no VMEM blowup)."""
    if dim <= align:
        return dim                                   # full (small) extent
    b = (min(target, dim) // align) * align
    return max(align, b)


def _ensure_multi_block(R, rt, r_align, L, lt, l_align):
    """Guarantee >=2 blocks on a 'parallel' axis so both v7x TCs get work."""
    if pl.cdiv(R, rt) * pl.cdiv(L, lt) >= 2:
        return rt, lt
    if R > r_align:
        return _round_up(pl.cdiv(R, 2), r_align), lt
    if L > l_align:
        return rt, _round_up(pl.cdiv(L, 2), l_align)
    return rt, lt                                    # activation genuinely tiny


# ---------------------------------------------------------------------------
# Kernel
# ---------------------------------------------------------------------------
def _make_scale_kernel(bias_term, quant_output, bitwidth, feature_frac):
    qmin = -(2.0 ** (bitwidth - 1))
    qmax = 2.0 ** (bitwidth - 1) - 1.0
    out_inv_scale = float(2.0 ** (-feature_frac))

    def kernel(x_ref, p_ref, o_ref):
        # Compute in f32 so bf16/fp8 inputs round like the f32 torch reference.
        x = x_ref[...].astype(jnp.float32)
        w = p_ref[:, 0:1].astype(jnp.float32)         # per-row (= per-channel)
        y = x * w
        if bias_term:
            y = y + p_ref[:, 1:2].astype(jnp.float32)
        if quant_output:
            # 2^feature_frac pre-scale is already folded into w/b in the
            # wrapper; only round/clip/rescale remain on the hot path.
            y = jnp.clip(jnp.round(y), qmin, qmax) * out_inv_scale
        o_ref[...] = y.astype(o_ref.dtype)

    return kernel


# ---------------------------------------------------------------------------
# Wrapper (== QuantizedScale.forward)
# ---------------------------------------------------------------------------
def quantized_scale(x, weight, bias=None, *, weight_frac=None, bias_frac=None,
                    feature_frac=0, bitwidth=8,
                    quant_weight=True, quant_bias=True, quant_output=True,
                    row_tile=512, lane_tile=2048):
    """Pallas equivalent of QuantizedScale.forward.

    x:      (B, C, H, W) activation.
    weight: per-channel scale, any shape reshapeable to (C,)   (module: (1,C,1,1)).
    bias:   per-channel bias or None                            (module: (1,C,1,1)).
    *_frac: fixed-point fraction bits (per-channel for params, scalar for output).
    """
    B, C, H, W = x.shape
    dtype = x.dtype
    bias_term = bias is not None
    feature_frac = float(feature_frac)

    # ---- parameter path: tiny (C elements), plain JAX in the wrapper ----
    w = jnp.asarray(weight, jnp.float32).reshape(C)
    if quant_weight:
        w = _fake_quant(w, bitwidth, weight_frac)
    if bias_term:
        b = jnp.asarray(bias, jnp.float32).reshape(C)
        if quant_bias:
            b = _fake_quant(b, bitwidth, bias_frac)
    if quant_output:
        # Fold the output fake-quant pre-scale (exact power-of-two) into the
        # per-channel params so the kernel saves one multiply per element.
        out_scale = jnp.float32(2.0 ** feature_frac)
        w = w * out_scale
        if bias_term:
            b = b * out_scale

    # ---- lane-dense activation layout: (B, C, H, W) -> (B*C, H*W) ----
    R, L = B * C, H * W
    x2 = x.reshape(R, L)
    p_rows = jnp.broadcast_to(w[None, :], (B, C)).reshape(R, 1)
    if bias_term:
        b_rows = jnp.broadcast_to(b[None, :], (B, C)).reshape(R, 1)
        p_rows = jnp.concatenate([p_rows, b_rows], axis=1)   # (R, 2)
    P = p_rows.shape[1]

    # ---- tiling: (8,128)-aligned blocks + cdiv grid (ragged edge masked) ----
    r_align = _row_align(dtype)
    rt = _pick_block(R, row_tile, r_align)
    lt = _pick_block(L, lane_tile, 128)
    rt, lt = _ensure_multi_block(R, rt, r_align, L, lt, 128)
    grid = (pl.cdiv(R, rt), pl.cdiv(L, lt))

    in_specs = [
        pl.BlockSpec((rt, lt), lambda i, j: (i, j)),   # x tile
        pl.BlockSpec((rt, P), lambda i, j: (i, 0)),    # fused per-row weight/bias
    ]
    out_specs = pl.BlockSpec((rt, lt), lambda i, j: (i, j))

    kernel = _make_scale_kernel(bias_term, quant_output, bitwidth, feature_frac)

    itemsize = x2.dtype.itemsize
    bytes_accessed = 2 * x2.size * itemsize + p_rows.size * p_rows.dtype.itemsize
    flops = x2.size * ((2 if bias_term else 1) + (3 if quant_output else 0))

    out = pl.pallas_call(
        kernel,
        out_shape=jax.ShapeDtypeStruct((R, L), dtype),
        grid=grid,
        in_specs=in_specs,
        out_specs=out_specs,
        compiler_params=pltpu.CompilerParams(
            dimension_semantics=("parallel", "parallel"),
            vmem_limit_bytes=48 * 1024 * 1024),
        cost_estimate=pl.CostEstimate(
            flops=flops, transcendentals=0, bytes_accessed=bytes_accessed),
    )(x2, p_rows)

    return out.reshape(B, C, H, W)


# ---------------------------------------------------------------------------
# Demo + reference check
# ---------------------------------------------------------------------------
if __name__ == "__main__":
    key = jax.random.PRNGKey(0)
    B, C, H, W = 2, 4, 16, 16
    bitwidth = 8

    kx, kw, kb = jax.random.split(key, 3)
    x = jax.random.normal(kx, (B, C, H, W), dtype=jnp.float32)
    weight = 1.0 + 0.5 * jax.random.normal(kw, (C,), dtype=jnp.float32)
    bias = 0.1 * jax.random.normal(kb, (C,), dtype=jnp.float32)

    weight_frac = jnp.array([6, 5, 6, 7], dtype=jnp.int32)   # per-channel (type=2)
    bias_frac = jnp.array([7, 7, 6, 7], dtype=jnp.int32)
    feature_frac = 5                                         # scalar output frac

    # Matches the module's for_training=True construction-time adjustment:
    #   bias.data += 2 ** (-1 - int(feature_frac))
    bias = bias + 2.0 ** (-1 - int(feature_frac))

    out = quantized_scale(
        x, weight, bias,
        weight_frac=weight_frac, bias_frac=bias_frac,
        feature_frac=feature_frac, bitwidth=bitwidth,
        quant_weight=True, quant_bias=True, quant_output=True)
    out = jax.block_until_ready(out)

    # Pure-JAX reference (same math as the torch forward, unfused).
    w_q = _fake_quant(jnp.asarray(weight, jnp.float32), bitwidth, weight_frac)
    b_q = _fake_quant(jnp.asarray(bias, jnp.float32), bitwidth, bias_frac)
    y = x * w_q.reshape(1, C, 1, 1) + b_q.reshape(1, C, 1, 1)
    scale = 2.0 ** feature_frac
    qmin = -(2.0 ** (bitwidth - 1))
    qmax = 2.0 ** (bitwidth - 1) - 1.0
    ref = jnp.clip(jnp.round(y * scale), qmin, qmax) * (2.0 ** (-feature_frac))

    if out.shape == ref.shape and bool(jnp.allclose(out, ref, atol=1e-6)):
        print("KERNEL_OK")
    else:
        raise SystemExit("mismatch between Pallas kernel output and reference")
</pallas_src>

<mosaic_0001>
module attributes {stable_mosaic.version = 11 : i64} {
  func.func @kernel(%arg0: i32, %arg1: i32, %arg2: memref<8x128xf32, #tpu.memory_space<vmem>>, %arg3: memref<8x2xf32, #tpu.memory_space<vmem>>, %arg4: memref<8x128xf32, #tpu.memory_space<vmem>>) attributes {dimension_semantics = [#tpu.dimension_semantics<parallel>, #tpu.dimension_semantics<parallel>], iteration_bounds = array<i64: 1, 2>, scalar_prefetch = 0 : i64, scratch_operands = 0 : i64, tpu.core_type = #tpu.core_type<tc>, window_params = [{transform_indices = @transform_0, window_bounds = array<i64: 8, 128>}, {transform_indices = @transform_1, window_bounds = array<i64: 8, 2>}, {transform_indices = @transform_2, window_bounds = array<i64: 8, 128>}]} {
    %c0 = arith.constant 0 : index
    %c0_0 = arith.constant 0 : index
    %0 = vector.load %arg2[%c0, %c0_0] : memref<8x128xf32, #tpu.memory_space<vmem>>, vector<8x128xf32>
    %c0_1 = arith.constant 0 : index
    %c0_2 = arith.constant 0 : index
    %1 = vector.load %arg3[%c0_1, %c0_2] : memref<8x2xf32, #tpu.memory_space<vmem>>, vector<8x1xf32>
    %2 = vector.broadcast %1 : vector<8x1xf32> to vector<8x128xf32>
    %3 = arith.mulf %0, %2 : vector<8x128xf32>
    %c0_3 = arith.constant 0 : index
    %c1 = arith.constant 1 : index
    %4 = vector.load %arg3[%c0_3, %c1] : memref<8x2xf32, #tpu.memory_space<vmem>>, vector<8x1xf32>
    %5 = vector.broadcast %4 : vector<8x1xf32> to vector<8x128xf32>
    %6 = arith.addf %3, %5 : vector<8x128xf32>
    %7 = math.roundeven %6 : vector<8x128xf32>
    %cst = arith.constant -1.280000e+02 : f32
    %cst_4 = arith.constant 1.270000e+02 : f32
    %8 = vector.broadcast %cst : f32 to vector<8x128xf32>
    %9 = arith.maximumf %8, %7 : vector<8x128xf32>
    %10 = vector.broadcast %cst_4 : f32 to vector<8x128xf32>
    %11 = arith.minimumf %10, %9 : vector<8x128xf32>
    %cst_5 = arith.constant 3.125000e-02 : f32
    %12 = vector.broadcast %cst_5 : f32 to vector<8x128xf32>
    %13 = arith.mulf %11, %12 : vector<8x128xf32>
    %c0_6 = arith.constant 0 : index
    %c0_7 = arith.constant 0 : index
    %14 = vector.load %arg4[%c0_6, %c0_7] : memref<8x128xf32, #tpu.memory_space<vmem>>, vector<8x128xf32>
    tpu.vector_store %arg4[%c0_6, %c0_7], %13 {strides = array<i32>} : memref<8x128xf32, #tpu.memory_space<vmem>>, vector<8x128xf32>,
    return
  }
  func.func @transform_0(%arg0: i32, %arg1: i32) -> (i32, i32) {
    %c0_i32 = arith.constant 0 : i32
    return %arg0, %arg1 : i32, i32
  }
  func.func @transform_1(%arg0: i32, %arg1: i32) -> (i32, i32) {
    %c0_i32 = arith.constant 0 : i32
    %c0_i32_0 = arith.constant 0 : i32
    return %arg0, %c0_i32 : i32, i32
  }
  func.func @transform_2(%arg0: i32, %arg1: i32) -> (i32, i32) {
    %c0_i32 = arith.constant 0 : i32
    return %arg0, %arg1 : i32, i32
  }
}

</mosaic_0001>

<llo_original>
// kernel: tpu_custom_call.1
$region0: #{tpu_custom_call.1}
  #allocation0 [shape = 'u32[]', space=smem, size = 0x4, offset = 0x4, fixed_abs, tag = 'smem constant byte address 0x4 - core index']
  #allocation1 [shape = 'u32[144,128]{1,0:T(1,128)}', space=vmem, size = 0x12000, scoped, tag = 'internal scratch']
  %s0 = inlined_call_operand.hbm [shape: f32[8,256], index: 0, kind: input, shape index: {}]
  %s1 = inlined_call_operand.vmem [shape: f32[8,2], index: 1, kind: input, shape index: {}]
  %s2 = inlined_call_operand.hbm [shape: f32[8,256], index: 2, kind: output, shape index: {}]
  %s3 = sld [smem:[#allocation0]]
  $region45: #{tpu_custom_call.1} parent=0
    _
  %s5 = ssub.s32 1, %s3
  %s6 = scalar_select 0, %s5, %s3
  $region1: #{tpu_custom_call.1} parent=0
    #allocation2 [shape = 'u8[8192]{0}', space=vmem, size = 0x2000, scoped, tag = 'input window, operand 0']
    #allocation3 [shape = 's32[2]{0}', space=sflag, size = 0x8, scoped, tag = 'scoped memory for tpu_custom_call.1']
    #allocation4 [shape = 's32[2]{0}', space=sflag, size = 0x8, scoped, tag = 'scoped memory for tpu_custom_call.1']
    #allocation5 [shape = 'u8[8192]{0}', space=vmem, size = 0x2000, scoped, tag = 'output window, operand 0']
    %7 = vsyncpa [#allocation3], 0
    %s8 = scalar_lea.sflag [#allocation3], 1
    %9 = vsyncpa %s8, 0
    %10 = vsyncpa [#allocation4], 0
    %s11 = scalar_lea.sflag [#allocation4], 1
    %12 = vsyncpa %s11, 0
    loop: start=0, step=1, limit=4
    $region2: #{tpu_custom_call.1} parent=1 // loop_pre_header
      _
    $region3: #{tpu_custom_call.1} parent=1 // loop_header
      %s14 = sphi 0, %s18
      %p15 = scmp.ge.s32.totalorder %s14, 4
      %s21 = sphi 0, %s33
      %s22 = sphi 0, %s29
      %s23 = sphi 0, %s21
      %s24 = sphi 0, %s22
      %s25 = sphi 0, %s23
      %s26 = sphi 0, %s24
      %s38 = sphi 0, %s40
      %s41 = sphi 0, %s38
      %s42 = sphi 0, %s41
      %s58 = sphi 0, %s42
      %s64 = sphi 0, %s66
      %s67 = sphi 0, %s64
      %s68 = sphi 0, %s67
      %s84 = sphi 0, %s68
      %s92 = sphi 0, %s94
      %s95 = sphi 0, %s92
      %s96 = sphi 0, %s95
      %s112 = sphi 0, %s96
    $region4: #{tpu_custom_call.1} parent=1 // loop_header_branch
      %17 = sbr.rel (%p15) target = $region8
    $region5: #{tpu_custom_call.1} parent=1 // loop_body
      %s19 = ssub.s32 %s14, 1
      %s20 = ssub.s32 %s14, 2
      %s27 = sadd.s32 1, %s22
      %p28 = scmp.ge.s32.totalorder %s27, 2
      %s29 = scalar_select %p28, 0, %s27
      %s30 = sadd.s32 1, %s21
      %s31 = scalar_select %p28, %s30, %s21
      %p32 = scmp.ge.s32.totalorder %s31, 1
      %s33 = scalar_select %p32, 0, %s31
      %s34 = ssub.s32 %s21, %s33
      %s35 = ssub.s32 %s22, %s29
      %s36 = sor.u32 %s34, %s35
      %p37 = scmp.eq.s32.totalorder %s36, 0
      %s39 = sadd.s32 %s38, 1
      %s40 = scalar_select %p37, %s38, %s39
      %p43 = pneg %p37
      %p44 = scmp.eq.s32.totalorder %s14, 1
      %p45 = por %p43, %p44
      %p46 = scmp.ne.s32.totalorder %s38, %s41
      %p47 = scmp.eq.s32.totalorder %s14, 0
      %p48 = por %p46, %p47
      %p49 = scmp.ne.s32.totalorder %s38, %s41
      %p50 = scmp.eq.s32.totalorder %s19, 1
      %p51 = por %p49, %p50
      %p52 = scmp.ne.s32.totalorder %s41, %s42
      %p53 = scmp.eq.s32.totalorder %s19, 0
      %p54 = por %p52, %p53
      %p55 = scmp.ne.s32.totalorder %s41, %s42
      %p56 = scmp.eq.s32.totalorder %s20, 1
      %p57 = por %p55, %p56
      %p59 = scmp.ne.s32.totalorder %s42, %s58
      %p60 = scmp.eq.s32.totalorder %s20, 0
      %p61 = por %p59, %p60
      %s62 = ssub.s32 %s21, %s33
      %p63 = scmp.eq.s32.totalorder %s62, 0
      %s65 = sadd.s32 %s64, 1
      %s66 = scalar_select %p63, %s64, %s65
      %p69 = pneg %p63
      %p70 = scmp.eq.s32.totalorder %s14, 1
      %p71 = por %p69, %p70
      %p72 = scmp.ne.s32.totalorder %s64, %s67
      %p73 = scmp.eq.s32.totalorder %s14, 0
      %p74 = por %p72, %p73
      %p75 = scmp.ne.s32.totalorder %s64, %s67
      %p76 = scmp.eq.s32.totalorder %s19, 1
      %p77 = por %p75, %p76
      %p78 = scmp.ne.s32.totalorder %s67, %s68
      %p79 = scmp.eq.s32.totalorder %s19, 0
      %p80 = por %p78, %p79
      %p81 = scmp.ne.s32.totalorder %s67, %s68
      %p82 = scmp.eq.s32.totalorder %s20, 1
      %p83 = por %p81, %p82
      %p85 = scmp.ne.s32.totalorder %s68, %s84
      %p86 = scmp.eq.s32.totalorder %s20, 0
      %p87 = por %p85, %p86
      %s88 = ssub.s32 %s21, %s33
      %s89 = ssub.s32 %s22, %s29
      %s90 = sor.u32 %s88, %s89
      %p91 = scmp.eq.s32.totalorder %s90, 0
      %s93 = sadd.s32 %s92, 1
      %s94 = scalar_select %p91, %s92, %s93
      %p97 = pneg %p91
      %p98 = scmp.eq.s32.totalorder %s14, 1
      %p99 = por %p97, %p98
      %p100 = scmp.ne.s32.totalorder %s92, %s95
      %p101 = scmp.eq.s32.totalorder %s14, 0
      %p102 = por %p100, %p101
      %p103 = scmp.ne.s32.totalorder %s92, %s95
      %p104 = scmp.eq.s32.totalorder %s19, 1
      %p105 = por %p103, %p104
      %p106 = scmp.ne.s32.totalorder %s95, %s96
      %p107 = scmp.eq.s32.totalorder %s19, 0
      %p108 = por %p106, %p107
      %p109 = scmp.ne.s32.totalorder %s95, %s96
      %p110 = scmp.eq.s32.totalorder %s20, 1
      %p111 = por %p109, %p110
      %p113 = scmp.ne.s32.totalorder %s96, %s112
      %p114 = scmp.eq.s32.totalorder %s20, 0
      %p115 = por %p113, %p114
      %p116 = scmp.le.s32.totalorder 1, %s14
      %p117 = scmp.lt.s32.totalorder %s14, 3
      %p118 = pnand %p116, %p117
      %p119 = pneg %p118
      // Predicated region
      $region9: #{tpu_custom_call.1} parent=5 // pred_check
        _
      $region10: #{tpu_custom_call.1} parent=5 // pred_check_branch
        %121 = sbr.rel (%p118) target = $region12
      $region11: #{tpu_custom_call.1} parent=5 // pred_region
        %s122 = ssub.s32 %s14, 1
        // Predicated region
        $region13: #{tpu_custom_call.1} parent=11 // pred_check
          %p123 = pneg %p80
        $region14: #{tpu_custom_call.1} parent=11 // pred_check_branch
          %125 = sbr.rel (%p123) target = $region16
        $region15: #{tpu_custom_call.1} parent=11 // pred_region
          %p126 = scmp.lt.s32.totalorder %s23, 0
          %s127 = scalar_select %p126, %s23, 0
          %s128 = smul.addr %s127, 8
          %s129 = scalar_lea.vmem %s1, %s128
        $region16: #{tpu_custom_call.1} parent=11 // pred_fallthru
          _
      $region12: #{tpu_custom_call.1} parent=5 // pred_fallthru
        _
      %p130 = scmp.lt.s32.totalorder %s14, 2
      // Predicated region
      $region17: #{tpu_custom_call.1} parent=5 // pred_check
        %p131 = pneg %p130
      $region18: #{tpu_custom_call.1} parent=5 // pred_check_branch
        %133 = sbr.rel (%p131) target = $region20
      $region19: #{tpu_custom_call.1} parent=5 // pred_region
        // Predicated region
        $region21: #{tpu_custom_call.1} parent=19 // pred_check
          %p134 = pneg %p48
        $region22: #{tpu_custom_call.1} parent=19 // pred_check_branch
          %136 = sbr.rel (%p134) target = $region24
        $region23: #{tpu_custom_call.1} parent=19 // pred_region
          %s137 = sand.u32 %s38, 1
          %s138 = scalar_lea.sflag [#allocation3], %s137
          %s139 = sand.u32 %s38, 1
          %s140 = smul.addr %s139, 8
          %s141 = scalar_lea.vmem [#allocation2], %s140
          %s143 = ssub.s32 128, 128
          %144 = vsyncadd %s138, %s143
          %s145 = smul.addr %s21, 2
          %s146 = sadd.s32 %s22, %s145
          %s147 = smul.addr %s146, 128
          %s148 = scalar_lea.hbm %s0, %s147
          %s150 = sshll.u32 %s141, 4
          %s151 = int_to_ptr.vmem [resolvable:$true] %s150
          %153 = dma.hbm_to_vmem [thread:$0]  %s148, 128, %s151, %s138
        $region24: #{tpu_custom_call.1} parent=19 // pred_fallthru
          _
      $region20: #{tpu_custom_call.1} parent=5 // pred_fallthru
        _
      %p154 = scmp.le.s32.totalorder 1, %s14
      %p155 = scmp.lt.s32.totalorder %s14, 3
      %p156 = pnand %p154, %p155
      %p157 = pneg %p156
      // Predicated region
      $region25: #{tpu_custom_call.1} parent=5 // pred_check
        _
      $region26: #{tpu_custom_call.1} parent=5 // pred_check_branch
        %159 = sbr.rel (%p156) target = $region28
      $region27: #{tpu_custom_call.1} parent=5 // pred_region
        %s160 = ssub.s32 %s14, 1
        %s161 = sand.u32 %s41, 1
        %s162 = scalar_lea.sflag [#allocation3], %s161
        %s163 = sand.u32 %s41, 1
        %s164 = smul.addr %s163, 8
        %s165 = scalar_lea.vmem [#allocation2], %s164
        // Predicated region
        $region29: #{tpu_custom_call.1} parent=27 // pred_check
          %p166 = pneg %p54
        $region30: #{tpu_custom_call.1} parent=27 // pred_check_branch
          %168 = sbr.rel (%p166) target = $region32
        $region31: #{tpu_custom_call.1} parent=27 // pred_region
          %169 = dma.done %s162, 128
        $region32: #{tpu_custom_call.1} parent=27 // pred_fallthru
          _
        %s170 = sand.u32 %s41, 1
        %s171 = scalar_lea.sflag [#allocation3], %s170
        %s172 = sand.u32 %s41, 1
        %s173 = smul.addr %s172, 8
        %s174 = scalar_lea.vmem [#allocation2], %s173
        %p175 = pneg %p54
        %p176 = pneg %p51
        %p177 = scmp.lt.s32.totalorder %s23, 0
        %s178 = scalar_select %p177, %s23, 0
        %s179 = smul.addr %s178, 8
        %s180 = scalar_lea.vmem %s1, %s179
        %p181 = pneg %p80
        %p182 = pneg %p77
        %p183 = pneg %p108
        %p184 = pneg %p105
        %s185 = sand.u32 %s95, 1
        %s186 = scalar_lea.sflag [#allocation4], %s185
        %s187 = sand.u32 %s95, 1
        %s188 = smul.addr %s187, 8
        %s189 = scalar_lea.vmem [#allocation5], %s188
        %p190 = scmp.lt.s32.totalorder %s23, 0
        %s191 = scalar_select %p190, %s23, 0
        %s192 = smul.addr %s191, 8
        %s193 = scalar_lea.vmem %s1, %s192
        %v194 = vld [vmem:[%s165] sm:$0xff]
        %v195 = vld [vmem:[%s193] sm:$0xff]
        %197 = vset.pattern.permute.xlu0 0
        %198 = vperm.xlu0 %197, %v195
        %v199 = vpop.permute.xlu0 %198
        %v201 = vmul.f32 %v194, %v199
        %202 = vset.pattern.permute.xlu0 1
        %203 = vperm.xlu0 %202, %v195
        %v204 = vpop.permute.xlu0 %203
        %v206 = vadd.f32 %v201, %v204
        %v207 = vround.ne.pseudo %v206
        %v208 = vmax.f32 %v207, -128.0
        %v209 = vmin.f32 %v208, 127.0
        %v210 = vmul.f32 %v209, 0.03125
        %211 = vst [vmem:[%s189] sm:$0xff] %v210
        %s212 = sand.u32 %s95, 1
        %s213 = scalar_lea.sflag [#allocation4], %s212
        %s214 = sand.u32 %s95, 1
        %s215 = smul.addr %s214, 8
        %s216 = scalar_lea.vmem [#allocation5], %s215
        // Predicated region
        $region33: #{tpu_custom_call.1} parent=27 // pred_check
          %p217 = pneg %p105
        $region34: #{tpu_custom_call.1} parent=27 // pred_check_branch
          %219 = sbr.rel (%p217) target = $region36
        $region35: #{tpu_custom_call.1} parent=27 // pred_region
          %s221 = ssub.s32 128, 128
          %222 = vsyncadd %s213, %s221
          %s223 = smul.addr %s23, 2
          %s224 = sadd.s32 %s24, %s223
          %s225 = smul.addr %s224, 128
          %s226 = scalar_lea.hbm %s2, %s225
          %s228 = sshll.u32 %s216, 4
          %s229 = int_to_ptr.vmem [resolvable:$true] %s228
          %231 = dma.vmem_to_hbm [thread:$0]  %s229, 128, %s226, %s213
        $region36: #{tpu_custom_call.1} parent=27 // pred_fallthru
          _
      $region28: #{tpu_custom_call.1} parent=5 // pred_fallthru
        _
      %p232 = scmp.le.s32.totalorder 2, %s14
      // Predicated region
      $region37: #{tpu_custom_call.1} parent=5 // pred_check
        %p233 = pneg %p232
      $region38: #{tpu_custom_call.1} parent=5 // pred_check_branch
        %235 = sbr.rel (%p233) target = $region40
      $region39: #{tpu_custom_call.1} parent=5 // pred_region
        %s236 = ssub.s32 %s14, 2
        // Predicated region
        $region41: #{tpu_custom_call.1} parent=39 // pred_check
          %p237 = pneg %p111
        $region42: #{tpu_custom_call.1} parent=39 // pred_check_branch
          %239 = sbr.rel (%p237) target = $region44
        $region43: #{tpu_custom_call.1} parent=39 // pred_region
          %s240 = sand.u32 %s96, 1
          %s241 = scalar_lea.sflag [#allocation4], %s240
          %s242 = sand.u32 %s96, 1
          %s243 = smul.addr %s242, 8
          %s244 = scalar_lea.vmem [#allocation5], %s243
          %245 = dma.done %s241, 128
        $region44: #{tpu_custom_call.1} parent=39 // pred_fallthru
          _
      $region40: #{tpu_custom_call.1} parent=5 // pred_fallthru
        _
    $region6: #{tpu_custom_call.1} parent=1 // loop_footer
      %s18 = sadd.s32 1, %s14
    $region7: #{tpu_custom_call.1} parent=1 // loop_footer_branch
      %13 = sbr.rel target = $region3
    $region8: #{tpu_custom_call.1} parent=1 // loop_exit
      _
    %246 = vsyncpa [#allocation3], 1
    %s247 = scalar_lea.sflag [#allocation3], 1
    %248 = vsyncpa %s247, 1
    %249 = vsyncpa [#allocation4], 1
    %s250 = scalar_lea.sflag [#allocation4], 1
    %251 = vsyncpa %s250, 1

</llo_original>
